<compile_context>
chip_gen: v7x
topology: tpu7x:2x2x1
jax: 0.10.0
libtpu: 0.0.40
codegen_flags: <defaults>
</compile_context>

<pallas_src>
import math

import jax
import jax.numpy as jnp
import numpy as np
from jax.experimental import pallas as pl
from jax.experimental.pallas import tpu as pltpu

MAX_LEN = 5000               # module default
_BLOCK_BYTES = 1 << 20       # ~1 MiB f32 blocks -> ~6 MiB resident with double buffering


def _build_pe_rows(batch, d_model):
    """First `batch` rows of the module's sinusoidal buffer, as a numpy constant."""
    position = np.arange(batch, dtype=np.float32)[:, None]
    div_term = np.exp(np.arange(0, d_model, 2, dtype=np.float32)
                      * (-math.log(10000.0) / d_model))
    pe = np.zeros((batch, d_model), np.float32)
    pe[:, 0::2] = np.sin(position * div_term)
    pe[:, 1::2] = np.cos(position * div_term)
    return pe


def _add_kernel(x_ref, pe_ref, o_ref):
    # Pure streaming add: both operands are lane-dense, sublane-full VMEM tiles.
    # TODO(synk): train-mode dropout (p=0.1) omitted -- eval/inference forward only.
    o_ref[...] = x_ref[...] + pe_ref[...]


def _smallest_divisor_at_least(n, lo):
    for d in range(lo, n + 1):
        if n % d == 0:
            return d
    return n


def _largest_divisor_at_most(n, hi):
    d = max(1, min(n, hi))
    while n % d:
        d -= 1
    return d


def pytorch_positional_encoding(x, *, max_len=MAX_LEN):
    """x: (B, L, D) float32. Returns x + pe[:B] broadcast over L (eval-mode forward)."""
    B, L, D = x.shape
    assert B <= max_len, "module slices pe by x.size(0); need B <= max_len"

    pe_rows = _build_pe_rows(B, D)                       # (B, D) numpy constant
    flat = L * D
    period = (D * 128) // math.gcd(D, 128)               # lcm(D, 128)

    if flat % period == 0:
        # --- main path: fold columns into extra rows so sublanes are filled,
        # --- then tile lane-dense chunks that are whole multiples of lcm(D,128).
        Q = flat // period
        R = _smallest_divisor_at_least(Q, -(-8 // B)) if B < 8 else 1
        rows, cols = B * R, flat // R                     # cols % period == 0

        # Row tile: full extent unless the batch is huge; keep it a multiple of 8.
        max_tr = max(8, (4 << 20) // (period * 4))
        if rows <= max_tr or rows % 8:
            tr = rows
        else:
            tr = 8 * _largest_divisor_at_most(rows // 8, max_tr // 8)

        # Column tile: multiple of `period`, ~_BLOCK_BYTES, >= ~8 steps when big.
        n_per = cols // period
        p = max(1, min(_BLOCK_BYTES // (tr * period * 4),
                       max(1, n_per // 8), n_per))
        while n_per % p:
            p -= 1
        nc = n_per // p
        if nc > 1 and nc % 2:                             # prefer even steps (v7x: 2 TCs)
            for p2 in range(p, 0, -1):
                if n_per % p2 == 0 and (n_per // p2) % 2 == 0:
                    p = p2
                    break
            nc = n_per // p
        C = p * period
        nr = rows // tr

        x2 = x.reshape(rows, cols)
        # pe pre-tiled to the exact block width: constant column block index means a
        # single pe DMA per row block and a one-vadd kernel body.
        pe_full = np.repeat(np.tile(pe_rows, (1, C // D)), R, axis=0)   # (rows, C)

        out2 = pl.pallas_call(
            _add_kernel,
            out_shape=jax.ShapeDtypeStruct((rows, cols), x.dtype),
            grid=(nr, nc),
            in_specs=[
                pl.BlockSpec((tr, C), lambda i, j: (i, j)),
                pl.BlockSpec((tr, C), lambda i, j: (i, 0)),
            ],
            out_specs=pl.BlockSpec((tr, C), lambda i, j: (i, j)),
            compiler_params=pltpu.CompilerParams(
                dimension_semantics=("parallel", "parallel")),
        )(x2, jnp.asarray(pe_full, dtype=x.dtype))
        return out2.reshape(B, L, D)

    # --- fallback (L*D not a multiple of lcm(D,128)): pad the flattened axis to a
    # --- multiple of 128 so stores stay unmasked; pe is full padded width.
    # TODO(synk): full-width pe doubles the HBM read for these pathological shapes.
    flat_pad = -(-flat // 128) * 128
    x2 = jnp.pad(x.reshape(B, flat), ((0, 0), (0, flat_pad - flat)))
    pe_full = np.tile(pe_rows, (1, -(-flat_pad // D)))[:, :flat_pad]    # (B, flat_pad)

    C = _largest_divisor_at_most(flat_pad // 128,
                                 max(1, _BLOCK_BYTES // (max(B, 1) * 128 * 4))) * 128
    nc = flat_pad // C
    out2 = pl.pallas_call(
        _add_kernel,
        out_shape=jax.ShapeDtypeStruct((B, flat_pad), x.dtype),
        grid=(nc,),
        in_specs=[
            pl.BlockSpec((B, C), lambda j: (0, j)),
            pl.BlockSpec((B, C), lambda j: (0, j)),
        ],
        out_specs=pl.BlockSpec((B, C), lambda j: (0, j)),
        compiler_params=pltpu.CompilerParams(dimension_semantics=("parallel",)),
    )(x2, jnp.asarray(pe_full, dtype=x.dtype))
    return out2[:, :flat].reshape(B, L, D)


def reference(x):
    """Pure-JAX reference of the module's eval-mode forward."""
    B, L, D = x.shape
    pe = jnp.asarray(_build_pe_rows(B, D))
    return x + pe[:, None, :]            # pe[:x.size(0)] broadcast over time (module quirk)


if __name__ == "__main__":
    B, L, D = 2, 8, 64                   # d_model=64 matches the module's docstring example
    key = jax.random.PRNGKey(0)
    x = jax.random.normal(key, (B, L, D), jnp.float32)

    fwd = jax.jit(pytorch_positional_encoding)
    out = jax.block_until_ready(fwd(x))
    ref = jax.block_until_ready(reference(x))
    np.testing.assert_allclose(np.asarray(out), np.asarray(ref), rtol=1e-6, atol=1e-6)

    print("KERNEL_OK")
</pallas_src>

<mosaic_0001>
module attributes {stable_mosaic.version = 11 : i64} {
  func.func @_add_kernel(%arg0: i32, %arg1: i32, %arg2: memref<8x128xf32, #tpu.memory_space<vmem>>, %arg3: memref<8x128xf32, #tpu.memory_space<vmem>>, %arg4: memref<8x128xf32, #tpu.memory_space<vmem>>) attributes {dimension_semantics = [#tpu.dimension_semantics<parallel>, #tpu.dimension_semantics<parallel>], iteration_bounds = array<i64: 1, 1>, scalar_prefetch = 0 : i64, scratch_operands = 0 : i64, tpu.core_type = #tpu.core_type<tc>, window_params = [{transform_indices = @transform_0, window_bounds = array<i64: 8, 128>}, {transform_indices = @transform_1, window_bounds = array<i64: 8, 128>}, {transform_indices = @transform_2, window_bounds = array<i64: 8, 128>}]} {
    %c0 = arith.constant 0 : index
    %c0_0 = arith.constant 0 : index
    %0 = vector.load %arg2[%c0, %c0_0] : memref<8x128xf32, #tpu.memory_space<vmem>>, vector<8x128xf32>
    %c0_1 = arith.constant 0 : index
    %c0_2 = arith.constant 0 : index
    %1 = vector.load %arg3[%c0_1, %c0_2] : memref<8x128xf32, #tpu.memory_space<vmem>>, vector<8x128xf32>
    %2 = arith.addf %0, %1 : vector<8x128xf32>
    %c0_3 = arith.constant 0 : index
    %c0_4 = arith.constant 0 : index
    %3 = vector.load %arg4[%c0_3, %c0_4] : memref<8x128xf32, #tpu.memory_space<vmem>>, vector<8x128xf32>
    tpu.vector_store %arg4[%c0_3, %c0_4], %2 {strides = array<i32>} : memref<8x128xf32, #tpu.memory_space<vmem>>, vector<8x128xf32>,
    return
  }
  func.func @transform_0(%arg0: i32, %arg1: i32) -> (i32, i32) {
    %c0_i32 = arith.constant 0 : i32
    return %arg0, %arg1 : i32, i32
  }
  func.func @transform_1(%arg0: i32, %arg1: i32) -> (i32, i32) {
    %c0_i32 = arith.constant 0 : i32
    %c0_i32_0 = arith.constant 0 : i32
    return %arg0, %c0_i32 : i32, i32
  }
  func.func @transform_2(%arg0: i32, %arg1: i32) -> (i32, i32) {
    %c0_i32 = arith.constant 0 : i32
    return %arg0, %arg1 : i32, i32
  }
}

</mosaic_0001>

<llo_original>
// kernel: pytorch_positional_encoding.1
$region0: #{pytorch_positional_encoding.1}
  #allocation0 [shape = 'u32[]', space=smem, size = 0x4, offset = 0x4, fixed_abs, tag = 'smem constant byte address 0x4 - core index']
  #allocation1 [shape = 'u32[144,128]{1,0:T(1,128)}', space=vmem, size = 0x12000, scoped, tag = 'internal scratch']
  %s0 = inlined_call_operand.vmem [shape: f32[8,128], index: 0, kind: input, shape index: {}]
  %s1 = inlined_call_operand.vmem [shape: f32[8,128], index: 1, kind: input, shape index: {}]
  %s2 = inlined_call_operand.vmem [shape: f32[8,128], index: 2, kind: output, shape index: {}]
  %s3 = sld [smem:[#allocation0]]
  $region18: #{pytorch_positional_encoding.1} parent=0
    _
  %s5 = ssub.s32 1, %s3
  %s6 = scalar_select 0, %s5, %s3
  // Predicated region
  $region2: #{pytorch_positional_encoding.1} parent=0 // pred_check
    _
  $region3: #{pytorch_positional_encoding.1} parent=0 // pred_check_branch
    %8 = sbr.rel (0) target = $region5
  $region4: #{pytorch_positional_encoding.1} parent=0 // pred_region
    _
  $region5: #{pytorch_positional_encoding.1} parent=0 // pred_fallthru
    _
  // Predicated region
  $region6: #{pytorch_positional_encoding.1} parent=0 // pred_check
    _
  $region7: #{pytorch_positional_encoding.1} parent=0 // pred_check_branch
    %10 = sbr.rel (0) target = $region9
  $region8: #{pytorch_positional_encoding.1} parent=0 // pred_region
    _
  $region9: #{pytorch_positional_encoding.1} parent=0 // pred_fallthru
    _
  %v11 = vld [vmem:[%s0] sm:$0xff]
  %v12 = vld [vmem:[%s1] sm:$0xff]
  %v13 = vadd.f32 %v11, %v12
  %14 = vst [vmem:[%s2] sm:$0xff] %v13
  // Predicated region
  $region10: #{pytorch_positional_encoding.1} parent=0 // pred_check
    _
  $region11: #{pytorch_positional_encoding.1} parent=0 // pred_check_branch
    %16 = sbr.rel (0) target = $region13
  $region12: #{pytorch_positional_encoding.1} parent=0 // pred_region
    _
  $region13: #{pytorch_positional_encoding.1} parent=0 // pred_fallthru
    _
  // Predicated region
  $region14: #{pytorch_positional_encoding.1} parent=0 // pred_check
    _
  $region15: #{pytorch_positional_encoding.1} parent=0 // pred_check_branch
    %18 = sbr.rel (0) target = $region17
  $region16: #{pytorch_positional_encoding.1} parent=0 // pred_region
    _
  $region17: #{pytorch_positional_encoding.1} parent=0 // pred_fallthru
    _

</llo_original>
